<compile_context>
chip_gen: v7x
topology: tpu7x:2x2x1
jax: 0.10.0
libtpu: 0.0.40
codegen_flags: <defaults>
</compile_context>

<pallas_src>
import functools

import jax
import jax.numpy as jnp
from jax.experimental import pallas as pl
from jax.experimental.pallas import tpu as pltpu


# ----------------------------- helpers ---------------------------------------
def _apply_activation(y, activation):
    """Matches _get_activation_fn; unknown / '' / None -> identity."""
    if activation == "relu":
        return jnp.maximum(y, 0.0)
    if activation == "gelu":
        # PyTorch F.gelu defaults to exact erf, so approximate=False.
        return jax.nn.gelu(y, approximate=False)
    if activation == "tanh":
        return jnp.tanh(y)
    if activation == "sigmoid":
        return jax.nn.sigmoid(y)
    return y


def _round_up(v, m):
    return ((v + m - 1) // m) * m


@functools.lru_cache(maxsize=None)
def _vmem_capacity_bytes():
    """Physical VMEM per core, generation-aware (128 MiB v4/v5/v6, 64 MiB v7x)."""
    try:
        info = pltpu.get_tpu_info()
        cap = getattr(info, "vmem_capacity_bytes", None)
        if cap and int(cap) >= 16 * 1024 * 1024:
            return int(cap)
    except Exception:
        pass
    try:
        kind = jax.devices()[0].device_kind.lower()
    except Exception:
        kind = ""
    if "v7" in kind:
        return 64 * 1024 * 1024
    if any(g in kind for g in ("v4", "v5", "v6")):
        return 128 * 1024 * 1024
    return 64 * 1024 * 1024          # unknown chip: assume the small-VMEM case


def _vmem_limit_bytes(vmem_need):
    """Always pass an explicit scoped-VMEM limit (v5e's default is only ~16 MiB).

    Cap leaves headroom for compiler-internal scratch: ~96 MiB on 128-MiB
    chips, ~48 MiB on v7x (64 MiB physical).
    """
    cap = (_vmem_capacity_bytes() * 3) // 4
    return int(min(cap, max(2 * int(vmem_need), 32 * 1024 * 1024)))


def _default_fuse_budget():
    # ~48 MiB on v5e/v6e (128 MiB physical), ~24 MiB on v7x (64 MiB physical).
    return (_vmem_capacity_bytes() * 3) // 8


def _pick_tm(m, target=512):
    """Batch tile: big for bandwidth, but >= 2 grid steps when possible so the
    'parallel' axis can shard across v7x's two TensorCores."""
    if m <= 8:
        return m
    tm = min(target, m)
    if pl.cdiv(m, tm) < 2:
        tm = max(8, _round_up(pl.cdiv(m, 2), 8))
    return min(tm, m)


def _tile_m(m, target):
    if m <= target:
        return m
    return max((target // 8) * 8, 8)          # ragged last block OK (rows indep.)


def _tile_n(n, target):
    if n % 128 != 0:
        return n                              # keep lane-dense / full extent
    return min(n, max((target // 128) * 128, 128))


def _tile_k(k, target):
    # K tile must divide K exactly (OOB reads would corrupt the accumulator).
    if k <= target or k % 128 != 0:
        return k
    t = max((target // 128) * 128, 128)
    while k % t != 0:
        t -= 128
    return t


def _resident_spec(shape, single_buffer):
    """BlockSpec for a parameter whose index_map is constant across the grid."""
    index_map = lambda i: (0,) * len(shape)
    if single_buffer:
        # Single-buffer resident params: they never change, so double-buffering
        # them only wastes VMEM (matters most on v7x's 64 MiB).
        return pl.BlockSpec(shape, index_map, pipeline_mode=pl.Buffered(1))
    return pl.BlockSpec(shape, index_map)


# ------------------------ parameter preparation --------------------------------
def prepare_mlp_params(params, in_features, *, compute_dtype=jnp.bfloat16, lane=128):
    """Cast weights to compute_dtype and zero-pad feature widths to `lane` multiples.

    Weights stay (in, out).  Padded output columns of a layer may be nonzero
    after the activation (e.g. sigmoid(0)=0.5), but the next layer's padded
    input rows are zero so they contribute nothing; the wrapper slices the
    padded columns off the final output.  Biases stay f32 (tiny; added
    post-accumulation, keeps numerics)."""
    prepared = []
    prev = _round_up(in_features, lane)
    for (w, b) in params:
        kin, nout = w.shape
        nout_p = _round_up(nout, lane)
        w_p = jnp.zeros((prev, nout_p), compute_dtype)
        w_p = w_p.at[:kin, :nout].set(w.astype(compute_dtype))
        b_p = jnp.zeros((1, nout_p), jnp.float32)
        b_p = b_p.at[:, :nout].set(b.reshape(1, nout).astype(jnp.float32))
        prepared.append((w_p, b_p))
        prev = nout_p
    return prepared


def _fused_vmem_estimate(tm, k_in, prepared, compute_dtype, *, io_itemsize=4,
                         single_buffer_params=True):
    """Conservative fused-path working-set estimate (per perf review)."""
    cb = jnp.dtype(compute_dtype).itemsize
    n_out = prepared[-1][0].shape[1]
    pbuf = 1 if single_buffer_params else 2
    param_bytes = sum(int(w.size) * w.dtype.itemsize + int(b.size) * b.dtype.itemsize
                      for (w, b) in prepared)
    io_bytes = 2 * io_itemsize * tm * (k_in + n_out)     # double-buffered x / out tiles
    # Per-layer live values: h_in (compute), f32 matmul+bias+act result, h_out (compute).
    work = max(tm * w.shape[0] * cb + tm * w.shape[1] * (4 + cb)
               for (w, _) in prepared)
    return pbuf * param_bytes + io_bytes + work


# ------------------------- fused whole-MLP kernel -----------------------------
def _fused_mlp_kernel(*refs, num_layers, activation, compute_dtype):
    """One batch tile through every Linear+act layer; intermediates stay in VMEM.

    NOTE: a ragged last batch tile computes on padded/stale rows; that is fine
    because the masked output store discards them — do NOT add reductions over
    the batch axis inside this kernel."""
    x_ref = refs[0]
    o_ref = refs[1 + 2 * num_layers]
    h = x_ref[...]
    if h.dtype != compute_dtype:
        h = h.astype(compute_dtype)
    for l in range(num_layers):
        w_ref = refs[1 + 2 * l]                     # already in compute_dtype
        b_ref = refs[2 + 2 * l]                     # f32, (1, N)
        y = jnp.dot(h, w_ref[...], preferred_element_type=jnp.float32)   # MXU, f32 acc
        y = _apply_activation(y + b_ref[...], activation)                 # f32 VPU/EUP
        # dropout = identity (eval mode)
        h = y if l == num_layers - 1 else y.astype(compute_dtype)         # carry narrow
    o_ref[...] = h.astype(o_ref.dtype)


def mlp_fused(x, prepared, activation, *, tm, compute_dtype=jnp.bfloat16,
              single_buffer_params=True):
    """Single pallas_call for the full MLP; all weights stay resident in VMEM.

    `x` and `prepared` must already have lane-aligned (128-multiple) feature
    widths — see prepare_mlp_params."""
    m, k_in = x.shape
    num_layers = len(prepared)
    n_out = prepared[-1][0].shape[1]
    tm = min(tm, m)

    widths = [k_in] + [w.shape[1] for (w, _) in prepared]
    io_b = x.dtype.itemsize
    param_bytes = sum(int(w.size) * w.dtype.itemsize + int(b.size) * b.dtype.itemsize
                      for (w, b) in prepared)
    flops = 2 * m * sum(int(w.shape[0] * w.shape[1]) for (w, _) in prepared)
    transcend = (m * sum(widths[1:])
                 if activation in ("gelu", "tanh", "sigmoid") else 0)
    bytes_accessed = io_b * m * (k_in + n_out) + param_bytes

    kernel = functools.partial(_fused_mlp_kernel, num_layers=num_layers,
                               activation=activation, compute_dtype=compute_dtype)

    def build(single_buffer):
        in_specs = [pl.BlockSpec((tm, k_in), lambda i: (i, 0))]
        operands = [x]
        for (w, b) in prepared:
            in_specs.append(_resident_spec(w.shape, single_buffer))
            in_specs.append(_resident_spec(b.shape, single_buffer))
            operands += [w, b]
        vmem_need = _fused_vmem_estimate(tm, k_in, prepared, compute_dtype,
                                         io_itemsize=io_b,
                                         single_buffer_params=single_buffer)
        return pl.pallas_call(
            kernel,
            out_shape=jax.ShapeDtypeStruct((m, n_out), x.dtype),
            grid_spec=pltpu.PrefetchScalarGridSpec(
                num_scalar_prefetch=0,
                grid=(pl.cdiv(m, tm),),
                in_specs=in_specs,
                out_specs=pl.BlockSpec((tm, n_out), lambda i: (i, 0)),
            ),
            compiler_params=pltpu.CompilerParams(
                dimension_semantics=("parallel",),
                vmem_limit_bytes=_vmem_limit_bytes(vmem_need)),
            cost_estimate=pl.CostEstimate(flops=int(flops),
                                          transcendentals=int(transcend),
                                          bytes_accessed=int(bytes_accessed)),
        )(*operands)

    if single_buffer_params:
        try:
            return build(True)
        except Exception:
            # pipeline_mode=pl.Buffered(1) not supported by this jax build;
            # fall back to default double-buffered resident params.
            pass
    return build(False)


# --------------------- tiled single-layer fallback ----------------------------
def _linear_act_tiled_kernel(x_ref, w_ref, b_ref, o_ref, acc_ref, *,
                             activation, compute_dtype):
    k = pl.program_id(2)

    @pl.when(k == 0)
    def _():
        acc_ref[...] = jnp.zeros_like(acc_ref)

    xv = x_ref[...]
    if xv.dtype != compute_dtype:
        xv = xv.astype(compute_dtype)
    acc_ref[...] += jnp.dot(xv, w_ref[...], preferred_element_type=jnp.float32)

    @pl.when(k == pl.num_programs(2) - 1)
    def _():
        y = _apply_activation(acc_ref[...] + b_ref[...], activation)
        o_ref[...] = y.astype(o_ref.dtype)


def linear_act_tiled(x, w, b, activation, *, tm=512, tn=512, tk=1024,
                     compute_dtype=jnp.bfloat16):
    """y = act(x @ w + b) with M/N/K grid tiling and an f32 VMEM accumulator."""
    m, k_dim = x.shape
    k2, n = w.shape
    assert k_dim == k2
    if w.dtype != compute_dtype:
        w = w.astype(compute_dtype)            # one-time wrapper cast, halves W DMA
    b2 = b.reshape(1, n).astype(jnp.float32)
    tm = _tile_m(m, tm)
    tn = _tile_n(n, tn)
    tk = _tile_k(k_dim, tk)

    grid = (pl.cdiv(m, tm), pl.cdiv(n, tn), pl.cdiv(k_dim, tk))
    xb, wb, ob = x.dtype.itemsize, w.dtype.itemsize, x.dtype.itemsize
    vmem_need = 2 * (tm * tk * xb + tk * tn * wb + tm * tn * ob + tn * 4) + 4 * tm * tn

    kernel = functools.partial(_linear_act_tiled_kernel, activation=activation,
                               compute_dtype=compute_dtype)
    return pl.pallas_call(
        kernel,
        out_shape=jax.ShapeDtypeStruct((m, n), x.dtype),
        grid_spec=pltpu.PrefetchScalarGridSpec(
            num_scalar_prefetch=0,
            grid=grid,
            in_specs=[
                pl.BlockSpec((tm, tk), lambda i, j, k: (i, k)),
                pl.BlockSpec((tk, tn), lambda i, j, k: (k, j)),
                pl.BlockSpec((1, tn), lambda i, j, k: (0, j)),
            ],
            out_specs=pl.BlockSpec((tm, tn), lambda i, j, k: (i, j)),
            scratch_shapes=[pltpu.VMEM((tm, tn), jnp.float32)],
        ),
        compiler_params=pltpu.CompilerParams(
            dimension_semantics=("parallel", "parallel", "arbitrary"),
            vmem_limit_bytes=_vmem_limit_bytes(vmem_need)),
        cost_estimate=pl.CostEstimate(
            flops=int(2 * m * n * k_dim),
            transcendentals=int(m * n) if activation in ("gelu", "tanh", "sigmoid") else 0,
            bytes_accessed=int(xb * m * k_dim + wb * k_dim * n + 4 * n + ob * m * n)),
    )(x, w, b2)


# ------------------------------ MLP wrapper -----------------------------------
def init_mlp_params(key, hidesize, list_mlp):
    """Deterministic parameter init (PyTorch-style bounds).  W stored (in, out)."""
    dims = [hidesize] + list(list_mlp)
    params = []
    for l in range(len(dims) - 1):
        k_w, k_b, key = jax.random.split(key, 3)
        fan_in, fan_out = dims[l], dims[l + 1]
        bound = 1.0 / jnp.sqrt(fan_in)
        w = jax.random.uniform(k_w, (fan_in, fan_out), jnp.float32,
                               minval=-bound, maxval=bound)
        b = jax.random.uniform(k_b, (fan_out,), jnp.float32,
                               minval=-bound, maxval=bound)
        params.append((w, b))
    return params


def mlp_forward(params, x, activation, *, compute_dtype=jnp.bfloat16,
                fuse_vmem_budget=None, force_tiled=False):
    """Equivalent of MLP.forward (dropout = identity, eval mode)."""
    m, k_in = x.shape
    n_out = params[-1][0].shape[1]

    # One-time prep: weights -> compute_dtype, feature widths -> lane multiples.
    prepared = prepare_mlp_params(params, k_in, compute_dtype=compute_dtype)
    k_in_p = prepared[0][0].shape[0]
    x_p = x if k_in_p == k_in else jnp.pad(x, ((0, 0), (0, k_in_p - k_in)))

    tm = _pick_tm(m)
    if fuse_vmem_budget is None:
        fuse_vmem_budget = _default_fuse_budget()
    resident_est = _fused_vmem_estimate(tm, k_in_p, prepared, compute_dtype,
                                        io_itemsize=x.dtype.itemsize,
                                        single_buffer_params=True)
    if not force_tiled and resident_est <= fuse_vmem_budget:
        out = mlp_fused(x_p, prepared, activation, tm=tm,
                        compute_dtype=compute_dtype)
    else:
        # Layers too large to keep resident: stream each layer with M/N/K tiling.
        h = x_p
        for (w, b) in prepared:
            h = linear_act_tiled(h, w, b, activation, compute_dtype=compute_dtype)
        out = h
    return out if out.shape[1] == n_out else out[:, :n_out]


def mlp_reference(params, x, activation):
    """Plain-JAX f32 reference (all supported activations)."""
    for (w, b) in params:
        x = _apply_activation(x @ w + b, activation)
    return x


# --------------------------------- main ---------------------------------------
if __name__ == "__main__":
    hidesize = 32
    list_mlp = [64, 32, 16]
    activation = "relu"
    batch = 8

    key = jax.random.PRNGKey(0)
    k_x, k_p = jax.random.split(key)
    x = jax.random.normal(k_x, (batch, hidesize), jnp.float32)
    params = init_mlp_params(k_p, hidesize, list_mlp)
    ref = mlp_reference(params, x, activation)

    # 1) fused whole-MLP kernel, default bf16 MXU operands / f32 accumulation
    out = jax.block_until_ready(mlp_forward(params, x, activation))
    assert out.shape == (batch, list_mlp[-1]), out.shape
    assert jnp.allclose(out, ref, atol=5e-2, rtol=5e-2), "fused bf16 mismatch"

    # 2) fused kernel in f32 (exact parity with the reference)
    out_f32 = jax.block_until_ready(
        mlp_forward(params, x, activation, compute_dtype=jnp.float32))
    assert jnp.allclose(out_f32, ref, atol=1e-5, rtol=1e-5), "fused f32 mismatch"

    # 3) forced per-layer tiled fallback path (bf16), same semantics
    out_tiled = jax.block_until_ready(
        mlp_forward(params, x, activation, force_tiled=True))
    assert out_tiled.shape == (batch, list_mlp[-1]), out_tiled.shape
    assert jnp.allclose(out_tiled, ref, atol=5e-2, rtol=5e-2), "tiled MLP mismatch"

    # 4) tiled single layer: f32 accumulate across K grid steps ...
    kt = jax.random.PRNGKey(1)
    k_a, k_w, k_b = jax.random.split(kt, 3)
    xa = jax.random.normal(k_a, (256, 512), jnp.float32)
    wa = jax.random.normal(k_w, (512, 384), jnp.float32) * (1.0 / 512 ** 0.5)
    ba = jax.random.normal(k_b, (384,), jnp.float32)
    yr = jnp.maximum(xa @ wa + ba, 0.0)
    yt = jax.block_until_ready(
        linear_act_tiled(xa, wa, ba, "relu", tm=128, tn=128, tk=256,
                         compute_dtype=jnp.float32))
    assert jnp.allclose(yt, yr, atol=1e-3, rtol=1e-3), "tiled f32 mismatch"
    #    ... and with default (bf16, large-tile) settings
    yt_bf = jax.block_until_ready(linear_act_tiled(xa, wa, ba, "relu"))
    assert jnp.allclose(yt_bf, yr, atol=5e-2, rtol=5e-2), "tiled bf16 mismatch"

    print("KERNEL_OK")
</pallas_src>

<mosaic_0001>
module attributes {stable_mosaic.version = 11 : i64} {
  func.func @_fused_mlp_kernel(%arg0: i32, %arg1: memref<8x128xf32, #tpu.memory_space<vmem>>, %arg2: memref<128x128xbf16, #tpu.memory_space<vmem>>, %arg3: memref<1x128xf32, #tpu.memory_space<vmem>>, %arg4: memref<128x128xbf16, #tpu.memory_space<vmem>>, %arg5: memref<1x128xf32, #tpu.memory_space<vmem>>, %arg6: memref<128x128xbf16, #tpu.memory_space<vmem>>, %arg7: memref<1x128xf32, #tpu.memory_space<vmem>>, %arg8: memref<8x128xf32, #tpu.memory_space<vmem>>) attributes {dimension_semantics = [#tpu.dimension_semantics<parallel>], iteration_bounds = array<i64: 1>, scalar_prefetch = 0 : i64, scratch_operands = 0 : i64, tpu.core_type = #tpu.core_type<tc>, window_params = [{transform_indices = @transform_0, window_bounds = array<i64: 8, 128>}, {pipeline_mode = #tpu.pipeline_mode<synchronous>, transform_indices = @transform_1, window_bounds = array<i64: 128, 128>}, {pipeline_mode = #tpu.pipeline_mode<synchronous>, transform_indices = @transform_2, window_bounds = array<i64: 1, 128>}, {pipeline_mode = #tpu.pipeline_mode<synchronous>, transform_indices = @transform_3, window_bounds = array<i64: 128, 128>}, {pipeline_mode = #tpu.pipeline_mode<synchronous>, transform_indices = @transform_4, window_bounds = array<i64: 1, 128>}, {pipeline_mode = #tpu.pipeline_mode<synchronous>, transform_indices = @transform_5, window_bounds = array<i64: 128, 128>}, {pipeline_mode = #tpu.pipeline_mode<synchronous>, transform_indices = @transform_6, window_bounds = array<i64: 1, 128>}, {transform_indices = @transform_7, window_bounds = array<i64: 8, 128>}]} {
    %c0 = arith.constant 0 : index
    %c0_0 = arith.constant 0 : index
    %0 = vector.load %arg1[%c0, %c0_0] : memref<8x128xf32, #tpu.memory_space<vmem>>, vector<8x128xf32>
    %1 = arith.truncf %0 : vector<8x128xf32> to vector<8x128xbf16>
    %c0_1 = arith.constant 0 : index
    %c0_2 = arith.constant 0 : index
    %2 = vector.load %arg2[%c0_1, %c0_2] : memref<128x128xbf16, #tpu.memory_space<vmem>>, vector<128x128xbf16>
    %cst = arith.constant dense<0.000000e+00> : vector<8x128xf32>
    %3 = tpu.matmul %1, %2, %cst {dimension_numbers = #tpu.dot_dimension_numbers<[1], [0], [0], [1], [0, 0, 1, 1], [], []>} : vector<8x128xbf16>, vector<128x128xbf16>, vector<8x128xf32> -> vector<8x128xf32>
    %c0_3 = arith.constant 0 : index
    %c0_4 = arith.constant 0 : index
    %4 = vector.load %arg3[%c0_3, %c0_4] : memref<1x128xf32, #tpu.memory_space<vmem>>, vector<1x128xf32>
    %5 = vector.broadcast %4 : vector<1x128xf32> to vector<8x128xf32>
    %6 = arith.addf %3, %5 : vector<8x128xf32>
    %cst_5 = arith.constant 0.000000e+00 : f32
    %7 = vector.broadcast %cst_5 : f32 to vector<8x128xf32>
    %8 = arith.maximumf %6, %7 : vector<8x128xf32>
    %9 = arith.truncf %8 : vector<8x128xf32> to vector<8x128xbf16>
    %c0_6 = arith.constant 0 : index
    %c0_7 = arith.constant 0 : index
    %10 = vector.load %arg4[%c0_6, %c0_7] : memref<128x128xbf16, #tpu.memory_space<vmem>>, vector<128x128xbf16>
    %cst_8 = arith.constant dense<0.000000e+00> : vector<8x128xf32>
    %11 = tpu.matmul %9, %10, %cst_8 {dimension_numbers = #tpu.dot_dimension_numbers<[1], [0], [0], [1], [0, 0, 1, 1], [], []>} : vector<8x128xbf16>, vector<128x128xbf16>, vector<8x128xf32> -> vector<8x128xf32>
    %c0_9 = arith.constant 0 : index
    %c0_10 = arith.constant 0 : index
    %12 = vector.load %arg5[%c0_9, %c0_10] : memref<1x128xf32, #tpu.memory_space<vmem>>, vector<1x128xf32>
    %13 = vector.broadcast %12 : vector<1x128xf32> to vector<8x128xf32>
    %14 = arith.addf %11, %13 : vector<8x128xf32>
    %cst_11 = arith.constant 0.000000e+00 : f32
    %15 = vector.broadcast %cst_11 : f32 to vector<8x128xf32>
    %16 = arith.maximumf %14, %15 : vector<8x128xf32>
    %17 = arith.truncf %16 : vector<8x128xf32> to vector<8x128xbf16>
    %c0_12 = arith.constant 0 : index
    %c0_13 = arith.constant 0 : index
    %18 = vector.load %arg6[%c0_12, %c0_13] : memref<128x128xbf16, #tpu.memory_space<vmem>>, vector<128x128xbf16>
    %cst_14 = arith.constant dense<0.000000e+00> : vector<8x128xf32>
    %19 = tpu.matmul %17, %18, %cst_14 {dimension_numbers = #tpu.dot_dimension_numbers<[1], [0], [0], [1], [0, 0, 1, 1], [], []>} : vector<8x128xbf16>, vector<128x128xbf16>, vector<8x128xf32> -> vector<8x128xf32>
    %c0_15 = arith.constant 0 : index
    %c0_16 = arith.constant 0 : index
    %20 = vector.load %arg7[%c0_15, %c0_16] : memref<1x128xf32, #tpu.memory_space<vmem>>, vector<1x128xf32>
    %21 = vector.broadcast %20 : vector<1x128xf32> to vector<8x128xf32>
    %22 = arith.addf %19, %21 : vector<8x128xf32>
    %cst_17 = arith.constant 0.000000e+00 : f32
    %23 = vector.broadcast %cst_17 : f32 to vector<8x128xf32>
    %24 = arith.maximumf %22, %23 : vector<8x128xf32>
    %c0_18 = arith.constant 0 : index
    %c0_19 = arith.constant 0 : index
    %25 = vector.load %arg8[%c0_18, %c0_19] : memref<8x128xf32, #tpu.memory_space<vmem>>, vector<8x128xf32>
    tpu.vector_store %arg8[%c0_18, %c0_19], %24 {strides = array<i32>} : memref<8x128xf32, #tpu.memory_space<vmem>>, vector<8x128xf32>,
    return
  }
  func.func @transform_0(%arg0: i32) -> (i32, i32) {
    %c0_i32 = arith.constant 0 : i32
    %c0_i32_0 = arith.constant 0 : i32
    return %arg0, %c0_i32 : i32, i32
  }
  func.func @transform_1(%arg0: i32) -> (i32, i32) {
    %c0_i32 = arith.constant 0 : i32
    %c0_i32_0 = arith.constant 0 : i32
    %c0_i32_1 = arith.constant 0 : i32
    return %c0_i32, %c0_i32_0 : i32, i32
  }
  func.func @transform_2(%arg0: i32) -> (i32, i32) {
    %c0_i32 = arith.constant 0 : i32
    %c0_i32_0 = arith.constant 0 : i32
    %c0_i32_1 = arith.constant 0 : i32
    return %c0_i32, %c0_i32_0 : i32, i32
  }
  func.func @transform_3(%arg0: i32) -> (i32, i32) {
    %c0_i32 = arith.constant 0 : i32
    %c0_i32_0 = arith.constant 0 : i32
    %c0_i32_1 = arith.constant 0 : i32
    return %c0_i32, %c0_i32_0 : i32, i32
  }
  func.func @transform_4(%arg0: i32) -> (i32, i32) {
    %c0_i32 = arith.constant 0 : i32
    %c0_i32_0 = arith.constant 0 : i32
    %c0_i32_1 = arith.constant 0 : i32
    return %c0_i32, %c0_i32_0 : i32, i32
  }
  func.func @transform_5(%arg0: i32) -> (i32, i32) {
    %c0_i32 = arith.constant 0 : i32
    %c0_i32_0 = arith.constant 0 : i32
    %c0_i32_1 = arith.constant 0 : i32
    return %c0_i32, %c0_i32_0 : i32, i32
  }
  func.func @transform_6(%arg0: i32) -> (i32, i32) {
    %c0_i32 = arith.constant 0 : i32
    %c0_i32_0 = arith.constant 0 : i32
    %c0_i32_1 = arith.constant 0 : i32
    return %c0_i32, %c0_i32_0 : i32, i32
  }
  func.func @transform_7(%arg0: i32) -> (i32, i32) {
    %c0_i32 = arith.constant 0 : i32
    %c0_i32_0 = arith.constant 0 : i32
    return %arg0, %c0_i32 : i32, i32
  }
}

module attributes {stable_mosaic.version = 11 : i64} {
  func.func @_fused_mlp_kernel(%arg0: i32, %arg1: memref<8x128xf32, #tpu.memory_space<vmem>>, %arg2: memref<128x128xbf16, #tpu.memory_space<vmem>>, %arg3: memref<1x128xf32, #tpu.memory_space<vmem>>, %arg4: memref<128x128xbf16, #tpu.memory_space<vmem>>, %arg5: memref<1x128xf32, #tpu.memory_space<vmem>>, %arg6: memref<128x128xbf16, #tpu.memory_space<vmem>>, %arg7: memref<1x128xf32, #tpu.memory_space<vmem>>, %arg8: memref<8x128xf32, #tpu.memory_space<vmem>>) attributes {dimension_semantics = [#tpu.dimension_semantics<parallel>], iteration_bounds = array<i64: 1>, scalar_prefetch = 0 : i64, scratch_operands = 0 : i64, tpu.core_type = #tpu.core_type<tc>, window_params = [{transform_indices = @transform_0, window_bounds = array<i64: 8, 128>}, {pipeline_mode = #tpu.pipeline_mode<synchronous>, transform_indices = @transform_1, window_bounds = array<i64: 128, 128>}, {pipeline_mode = #tpu.pipeline_mode<synchronous>, transform_indices = @transform_2, window_bounds = array<i64: 1, 128>}, {pipeline_mode = #tpu.pipeline_mode<synchronous>, transform_indices = @transform_3, window_bounds = array<i64: 128, 128>}, {pipeline_mode = #tpu.pipeline_mode<synchronous>, transform_indices = @transform_4, window_bounds = array<i64: 1, 128>}, {pipeline_mode = #tpu.pipeline_mode<synchronous>, transform_indices = @transform_5, window_bounds = array<i64: 128, 128>}, {pipeline_mode = #tpu.pipeline_mode<synchronous>, transform_indices = @transform_6, window_bounds = array<i64: 1, 128>}, {transform_indices = @transform_7, window_bounds = array<i64: 8, 128>}]} {
    %c0 = arith.constant 0 : index
    %c0_0 = arith.constant 0 : index
    %0 = vector.load %arg1[%c0, %c0_0] : memref<8x128xf32, #tpu.memory_space<vmem>>, vector<8x128xf32>
    %1 = arith.truncf %0 : vector<8x128xf32> to vector<8x128xbf16>
    %c0_1 = arith.constant 0 : index
    %c0_2 = arith.constant 0 : index
    %2 = vector.load %arg2[%c0_1, %c0_2] : memref<128x128xbf16, #tpu.memory_space<vmem>>, vector<128x128xbf16>
    %cst = arith.constant dense<0.000000e+00> : vector<8x128xf32>
    %3 = tpu.matmul %1, %2, %cst {dimension_numbers = #tpu.dot_dimension_numbers<[1], [0], [0], [1], [0, 0, 1, 1], [], []>} : vector<8x128xbf16>, vector<128x128xbf16>, vector<8x128xf32> -> vector<8x128xf32>
    %c0_3 = arith.constant 0 : index
    %c0_4 = arith.constant 0 : index
    %4 = vector.load %arg3[%c0_3, %c0_4] : memref<1x128xf32, #tpu.memory_space<vmem>>, vector<1x128xf32>
    %5 = vector.broadcast %4 : vector<1x128xf32> to vector<8x128xf32>
    %6 = arith.addf %3, %5 : vector<8x128xf32>
    %cst_5 = arith.constant 0.000000e+00 : f32
    %7 = vector.broadcast %cst_5 : f32 to vector<8x128xf32>
    %8 = arith.maximumf %6, %7 : vector<8x128xf32>
    %9 = arith.truncf %8 : vector<8x128xf32> to vector<8x128xbf16>
    %c0_6 = arith.constant 0 : index
    %c0_7 = arith.constant 0 : index
    %10 = vector.load %arg4[%c0_6, %c0_7] : memref<128x128xbf16, #tpu.memory_space<vmem>>, vector<128x128xbf16>
    %cst_8 = arith.constant dense<0.000000e+00> : vector<8x128xf32>
    %11 = tpu.matmul %9, %10, %cst_8 {dimension_numbers = #tpu.dot_dimension_numbers<[1], [0], [0], [1], [0, 0, 1, 1], [], []>} : vector<8x128xbf16>, vector<128x128xbf16>, vector<8x128xf32> -> vector<8x128xf32>
    %c0_9 = arith.constant 0 : index
    %c0_10 = arith.constant 0 : index
    %12 = vector.load %arg5[%c0_9, %c0_10] : memref<1x128xf32, #tpu.memory_space<vmem>>, vector<1x128xf32>
    %13 = vector.broadcast %12 : vector<1x128xf32> to vector<8x128xf32>
    %14 = arith.addf %11, %13 : vector<8x128xf32>
    %cst_11 = arith.constant 0.000000e+00 : f32
    %15 = vector.broadcast %cst_11 : f32 to vector<8x128xf32>
    %16 = arith.maximumf %14, %15 : vector<8x128xf32>
    %17 = arith.truncf %16 : vector<8x128xf32> to vector<8x128xbf16>
    %c0_12 = arith.constant 0 : index
    %c0_13 = arith.constant 0 : index
    %18 = vector.load %arg6[%c0_12, %c0_13] : memref<128x128xbf16, #tpu.memory_space<vmem>>, vector<128x128xbf16>
    %cst_14 = arith.constant dense<0.000000e+00> : vector<8x128xf32>
    %19 = tpu.matmul %17, %18, %cst_14 {dimension_numbers = #tpu.dot_dimension_numbers<[1], [0], [0], [1], [0, 0, 1, 1], [], []>} : vector<8x128xbf16>, vector<128x128xbf16>, vector<8x128xf32> -> vector<8x128xf32>
    %c0_15 = arith.constant 0 : index
    %c0_16 = arith.constant 0 : index
    %20 = vector.load %arg7[%c0_15, %c0_16] : memref<1x128xf32, #tpu.memory_space<vmem>>, vector<1x128xf32>
    %21 = vector.broadcast %20 : vector<1x128xf32> to vector<8x128xf32>
    %22 = arith.addf %19, %21 : vector<8x128xf32>
    %cst_17 = arith.constant 0.000000e+00 : f32
    %23 = vector.broadcast %cst_17 : f32 to vector<8x128xf32>
    %24 = arith.maximumf %22, %23 : vector<8x128xf32>
    %c0_18 = arith.constant 0 : index
    %c0_19 = arith.constant 0 : index
    %25 = vector.load %arg8[%c0_18, %c0_19] : memref<8x128xf32, #tpu.memory_space<vmem>>, vector<8x128xf32>
    tpu.vector_store %arg8[%c0_18, %c0_19], %24 {strides = array<i32>} : memref<8x128xf32, #tpu.memory_space<vmem>>, vector<8x128xf32>,
    return
  }
  func.func @transform_0(%arg0: i32) -> (i32, i32) {
    %c0_i32 = arith.constant 0 : i32
    %c0_i32_0 = arith.constant 0 : i32
    return %arg0, %c0_i32 : i32, i32
  }
  func.func @transform_1(%arg0: i32) -> (i32, i32) {
    %c0_i32 = arith.constant 0 : i32
    %c0_i32_0 = arith.constant 0 : i32
    %c0_i32_1 = arith.constant 0 : i32
    return %c0_i32, %c0_i32_0 : i32, i32
  }
  func.func @transform_2(%arg0: i32) -> (i32, i32) {
    %c0_i32 = arith.constant 0 : i32
    %c0_i32_0 = arith.constant 0 : i32
    %c0_i32_1 = arith.constant 0 : i32
    return %c0_i32, %c0_i32_0 : i32, i32
  }
  func.func @transform_3(%arg0: i32) -> (i32, i32) {
    %c0_i32 = arith.constant 0 : i32
    %c0_i32_0 = arith.constant 0 : i32
    %c0_i32_1 = arith.constant 0 : i32
    return %c0_i32, %c0_i32_0 : i32, i32
  }
  func.func @transform_4(%arg0: i32) -> (i32, i32) {
    %c0_i32 = arith.constant 0 : i32
    %c0_i32_0 = arith.constant 0 : i32
    %c0_i32_1 = arith.constant 0 : i32
    return %c0_i32, %c0_i32_0 : i32, i32
  }
  func.func @transform_5(%arg0: i32) -> (i32, i32) {
    %c0_i32 = arith.constant 0 : i32
    %c0_i32_0 = arith.constant 0 : i32
    %c0_i32_1 = arith.constant 0 : i32
    return %c0_i32, %c0_i32_0 : i32, i32
  }
  func.func @transform_6(%arg0: i32) -> (i32, i32) {
    %c0_i32 = arith.constant 0 : i32
    %c0_i32_0 = arith.constant 0 : i32
    %c0_i32_1 = arith.constant 0 : i32
    return %c0_i32, %c0_i32_0 : i32, i32
  }
  func.func @transform_7(%arg0: i32) -> (i32, i32) {
    %c0_i32 = arith.constant 0 : i32
    %c0_i32_0 = arith.constant 0 : i32
    return %arg0, %c0_i32 : i32, i32
  }
}

</mosaic_0001>

<llo_original>
// kernel: tpu_custom_call.1
$region0: #{tpu_custom_call.1}
  #allocation0 [shape = 'u32[]', space=smem, size = 0x4, offset = 0x4, fixed_abs, tag = 'smem constant byte address 0x4 - core index']
  #allocation1 [shape = 'u32[144,128]{1,0:T(1,128)}', space=vmem, size = 0x12000, scoped, tag = 'internal scratch']
  %s0 = inlined_call_operand.hbm [shape: f32[8,128], index: 0, kind: input, shape index: {}]
  %s1 = inlined_call_operand.hbm [shape: bf16[128,128], index: 1, kind: input, shape index: {}]
  %s2 = inlined_call_operand.vmem [shape: f32[1,128], index: 2, kind: input, shape index: {}]
  %s3 = inlined_call_operand.hbm [shape: bf16[128,128], index: 3, kind: input, shape index: {}]
  %s4 = inlined_call_operand.vmem [shape: f32[1,128], index: 4, kind: input, shape index: {}]
  %s5 = inlined_call_operand.hbm [shape: bf16[128,128], index: 5, kind: input, shape index: {}]
  %s6 = inlined_call_operand.vmem [shape: f32[1,128], index: 6, kind: input, shape index: {}]
  %s7 = inlined_call_operand.hbm [shape: f32[8,128], index: 7, kind: output, shape index: {}]
  %s8 = sld [smem:[#allocation0]]
  $region54: #{tpu_custom_call.1} parent=0
    _
  %s10 = ssub.s32 1, %s8
  %s11 = scalar_select 0, %s10, %s8
  $region1: #{tpu_custom_call.1} parent=0
    #allocation2 [shape = 'u8[4096]{0}', space=vmem, size = 0x1000, scoped, tag = 'input window, operand 0, single buffered']
    #allocation3 [shape = 's32[1]{0}', space=sflag, size = 0x4, scoped, tag = 'scoped memory for tpu_custom_call.1']
    #allocation4 [shape = 's32[1]{0}', space=sflag, size = 0x4, scoped, tag = 'scoped memory for tpu_custom_call.1']
    #allocation5 [shape = 'u8[32768]{0}', space=vmem, size = 0x8000, scoped, tag = 'input window, operand 1, single buffered']
    #allocation6 [shape = 's32[1]{0}', space=sflag, size = 0x4, scoped, tag = 'scoped memory for tpu_custom_call.1']
    #allocation7 [shape = 'u8[32768]{0}', space=vmem, size = 0x8000, scoped, tag = 'input window, operand 3, single buffered']
    #allocation8 [shape = 'u8[32768]{0}', space=vmem, size = 0x8000, scoped, tag = 'input window, operand 5, single buffered']
    #allocation9 [shape = 's32[1]{0}', space=sflag, size = 0x4, scoped, tag = 'scoped memory for tpu_custom_call.1']
    #allocation10 [shape = 'u8[4096]{0}', space=vmem, size = 0x1000, scoped, tag = 'output window, operand 0, single buffered']
    %12 = vsyncpa [#allocation3], 0
    %13 = vsyncpa [#allocation6], 0
    %14 = vsyncpa [#allocation9], 0
    %15 = vsyncpa [#allocation4], 0
    // Predicated region
    $region2: #{tpu_custom_call.1} parent=1 // pred_check
      _
    $region3: #{tpu_custom_call.1} parent=1 // pred_check_branch
      %17 = sbr.rel (0) target = $region5
    $region4: #{tpu_custom_call.1} parent=1 // pred_region
      %s19 = ssub.s32 128, 128
      %20 = vsyncadd [#allocation3], %s19
      %s22 = sshll.u32 [#allocation2], 4
      %s23 = int_to_ptr.vmem [resolvable:$true] %s22
      %25 = dma.hbm_to_vmem [thread:$0]  %s0, 128, %s23, [#allocation3]
    $region5: #{tpu_custom_call.1} parent=1 // pred_fallthru
      _
    // Predicated region
    $region6: #{tpu_custom_call.1} parent=1 // pred_check
      _
    $region7: #{tpu_custom_call.1} parent=1 // pred_check_branch
      %27 = sbr.rel (0) target = $region9
    $region8: #{tpu_custom_call.1} parent=1 // pred_region
      %s29 = ssub.s32 1024, 1024
      %30 = vsyncadd [#allocation6], %s29
      %s31 = sshll.u32 [#allocation5], 4
      %s32 = int_to_ptr.vmem [resolvable:$true] %s31
      %37 = dma.hbm_to_vmem [thread:$0]  %s1, 1024, %s32, [#allocation6], 64, 64, 4
    $region9: #{tpu_custom_call.1} parent=1 // pred_fallthru
      _
    // Predicated region
    $region10: #{tpu_custom_call.1} parent=1 // pred_check
      _
    $region11: #{tpu_custom_call.1} parent=1 // pred_check_branch
      %39 = sbr.rel (0) target = $region13
    $region12: #{tpu_custom_call.1} parent=1 // pred_region
      _
    $region13: #{tpu_custom_call.1} parent=1 // pred_fallthru
      _
    // Predicated region
    $region14: #{tpu_custom_call.1} parent=1 // pred_check
      _
    $region15: #{tpu_custom_call.1} parent=1 // pred_check_branch
      %41 = sbr.rel (0) target = $region17
    $region16: #{tpu_custom_call.1} parent=1 // pred_region
      %s43 = ssub.s32 1024, 1024
      %44 = vsyncadd [#allocation6], %s43
      %s45 = sshll.u32 [#allocation7], 4
      %s46 = int_to_ptr.vmem [resolvable:$true] %s45
      %51 = dma.hbm_to_vmem [thread:$0]  %s3, 1024, %s46, [#allocation6], 64, 64, 4
    $region17: #{tpu_custom_call.1} parent=1 // pred_fallthru
      _
    // Predicated region
    $region18: #{tpu_custom_call.1} parent=1 // pred_check
      _
    $region19: #{tpu_custom_call.1} parent=1 // pred_check_branch
      %53 = sbr.rel (0) target = $region21
    $region20: #{tpu_custom_call.1} parent=1 // pred_region
      _
    $region21: #{tpu_custom_call.1} parent=1 // pred_fallthru
      _
    // Predicated region
    $region22: #{tpu_custom_call.1} parent=1 // pred_check
      _
    $region23: #{tpu_custom_call.1} parent=1 // pred_check_branch
      %55 = sbr.rel (0) target = $region25
    $region24: #{tpu_custom_call.1} parent=1 // pred_region
      %s57 = ssub.s32 1024, 1024
      %58 = vsyncadd [#allocation9], %s57
      %s59 = sshll.u32 [#allocation8], 4
      %s60 = int_to_ptr.vmem [resolvable:$true] %s59
      %65 = dma.hbm_to_vmem [thread:$0]  %s5, 1024, %s60, [#allocation9], 64, 64, 4
    $region25: #{tpu_custom_call.1} parent=1 // pred_fallthru
      _
    // Predicated region
    $region26: #{tpu_custom_call.1} parent=1 // pred_check
      _
    $region27: #{tpu_custom_call.1} parent=1 // pred_check_branch
      %67 = sbr.rel (0) target = $region29
    $region28: #{tpu_custom_call.1} parent=1 // pred_region
      _
    $region29: #{tpu_custom_call.1} parent=1 // pred_fallthru
      _
    // Predicated region
    $region30: #{tpu_custom_call.1} parent=1 // pred_check
      _
    $region31: #{tpu_custom_call.1} parent=1 // pred_check_branch
      %69 = sbr.rel (0) target = $region33
    $region32: #{tpu_custom_call.1} parent=1 // pred_region
      %70 = dma.done [#allocation3], 128
    $region33: #{tpu_custom_call.1} parent=1 // pred_fallthru
      _
    // Predicated region
    $region34: #{tpu_custom_call.1} parent=1 // pred_check
      _
    $region35: #{tpu_custom_call.1} parent=1 // pred_check_branch
      %72 = sbr.rel (0) target = $region37
    $region36: #{tpu_custom_call.1} parent=1 // pred_region
      %73 = dma.done [#allocation6], 1024
    $region37: #{tpu_custom_call.1} parent=1 // pred_fallthru
      _
    // Predicated region
    $region38: #{tpu_custom_call.1} parent=1 // pred_check
      _
    $region39: #{tpu_custom_call.1} parent=1 // pred_check_branch
      %75 = sbr.rel (0) target = $region41
    $region40: #{tpu_custom_call.1} parent=1 // pred_region
      %76 = dma.done [#allocation6], 1024
    $region41: #{tpu_custom_call.1} parent=1 // pred_fallthru
      _
    // Predicated region
    $region42: #{tpu_custom_call.1} parent=1 // pred_check
      _
    $region43: #{tpu_custom_call.1} parent=1 // pred_check_branch
      %78 = sbr.rel (0) target = $region45
    $region44: #{tpu_custom_call.1} parent=1 // pred_region
      %79 = dma.done [#allocation9], 1024
    $region45: #{tpu_custom_call.1} parent=1 // pred_fallthru
      _
    %v81 = vld [vmem:[#allocation2] sm:$0xff]
    %v82 = vpack.c.bf16 %v81, %v81
    %v83 = vld [vmem:[#allocation5] sm:$0xf]
    %v84 = vld [vmem:[#allocation5 + $0x4] sm:$0xf]
    %v85 = vld [vmem:[#allocation5 + $0x8] sm:$0xf]
    %v86 = vld [vmem:[#allocation5 + $0xc] sm:$0xf]
    %v87 = vld [vmem:[#allocation5 + $0x10] sm:$0xf]
    %v88 = vld [vmem:[#allocation5 + $0x14] sm:$0xf]
    %v89 = vld [vmem:[#allocation5 + $0x18] sm:$0xf]
    %v90 = vld [vmem:[#allocation5 + $0x1c] sm:$0xf]
    %v91 = vld [vmem:[#allocation5 + $0x20] sm:$0xf]
    %v92 = vld [vmem:[#allocation5 + $0x24] sm:$0xf]
    %v93 = vld [vmem:[#allocation5 + $0x28] sm:$0xf]
    %v94 = vld [vmem:[#allocation5 + $0x2c] sm:$0xf]
    %v95 = vld [vmem:[#allocation5 + $0x30] sm:$0xf]
    %v96 = vld [vmem:[#allocation5 + $0x34] sm:$0xf]
    %v97 = vld [vmem:[#allocation5 + $0x38] sm:$0xf]
    %v98 = vld [vmem:[#allocation5 + $0x3c] sm:$0xf]
    %v99 = vld [vmem:[%s2] sm:$0x1]
    %v101 = vlaneseq
    %v102 = vshrl.u32 %v101, 7
    %v103 = vsub.s32 0, %v102
    %v104 = vrot.slane %v99, %v103
    %v122 = vunpack.c.l.b16 %v83
    %v123 = vunpack.c.l.b16 %v84
    %v124 = vunpack.c.l.b16 %v85
    %v125 = vunpack.c.l.b16 %v86
    %v126 = vunpack.c.l.b16 %v87
    %v127 = vunpack.c.l.b16 %v88
    %v128 = vunpack.c.l.b16 %v89
    %v129 = vunpack.c.l.b16 %v90
    %v130 = vunpack.c.l.b16 %v91
    %v131 = vunpack.c.l.b16 %v92
    %v132 = vunpack.c.l.b16 %v93
    %v133 = vunpack.c.l.b16 %v94
    %v134 = vunpack.c.l.b16 %v95
    %v135 = vunpack.c.l.b16 %v96
    %v136 = vunpack.c.l.b16 %v97
    %v137 = vunpack.c.l.b16 %v98
    %v138 = vpack.c.b16 %v123, %v122
    %v139 = vpack.c.b16 %v125, %v124
    %v140 = vpack.c.b16 %v127, %v126
    %v141 = vpack.c.b16 %v129, %v128
    %v142 = vpack.c.b16 %v131, %v130
    %v143 = vpack.c.b16 %v133, %v132
    %v144 = vpack.c.b16 %v135, %v134
    %v145 = vpack.c.b16 %v137, %v136
    %154 = vmatprep.subr.bf16.mxu0 0
    %155 = vmatpush1.bf16.msra.mxu0 %v138
    %156 = vmatprep.subr.bf16.mxu0 0
    %157 = vmatpush1.bf16.msra.mxu0 %v139
    %158 = vmatprep.subr.bf16.mxu0 0
    %159 = vmatpush1.bf16.msra.mxu0 %v140
    %160 = vmatprep.subr.bf16.mxu0 0
    %161 = vmatpush1.bf16.msra.mxu0 %v141
    %162 = vmatprep.subr.bf16.mxu0 0
    %163 = vmatpush1.bf16.msra.mxu0 %v142
    %164 = vmatprep.subr.bf16.mxu0 0
    %165 = vmatpush1.bf16.msra.mxu0 %v143
    %166 = vmatprep.subr.bf16.mxu0 0
    %167 = vmatpush1.bf16.msra.mxu0 %v144
    %168 = vmatprep.subr.bf16.mxu0 0
    %169 = vmatpush1.bf16.msra.mxu0 %v145
    %170 = vmatprep.subr.bf16.mxu0 0
    %171 = vmatpush1.bf16.msra.mxu0 0
    %172 = vmatprep.subr.bf16.mxu0 0
    %173 = vmatpush1.bf16.msra.mxu0 0
    %174 = vmatprep.subr.bf16.mxu0 0
    %175 = vmatpush1.bf16.msra.mxu0 0
    %176 = vmatprep.subr.bf16.mxu0 0
    %177 = vmatpush1.bf16.msra.mxu0 0
    %178 = vmatprep.subr.bf16.mxu0 0
    %179 = vmatpush1.bf16.msra.mxu0 0
    %180 = vmatprep.subr.bf16.mxu0 0
    %181 = vmatpush1.bf16.msra.mxu0 0
    %182 = vmatprep.subr.bf16.mxu0 0
    %183 = vmatpush1.bf16.msra.mxu0 0
    %184 = vmatprep.subr.bf16.mxu0 0
    %185 = vmatpush1.bf16.msra.mxu0 0
    %186 = vmatprep.mubr.bf16.mxu0 0
    %187 = vmatmul.mubr.bf16.gmra.mrb[0].mxu0 %v82
    %v188 = vpop.f32.mrb[0].mxu0
    %v189 = vadd.f32 %v104, %v188
    %v190 = vpop.f32.mrb[0].mxu0
    %v191 = vpop.f32.mrb[0].mxu0
    %v192 = vpop.f32.mrb[0].mxu0
    %193 = vdwg.mxu0
    %v194 = vmax.f32 %v189, 0.0
    %v195 = vpack.c.bf16 %v194, %v194
    %v196 = vld [vmem:[#allocation7] sm:$0xf]
    %v197 = vld [vmem:[#allocation7 + $0x4] sm:$0xf]
    %v198 = vld [vmem:[#allocation7 + $0x8] sm:$0xf]
    %v199 = vld [vmem:[#allocation7 + $0xc] sm:$0xf]
    %v200 = vld [vmem:[#allocation7 + $0x10] sm:$0xf]
    %v201 = vld [vmem:[#allocation7 + $0x14] sm:$0xf]
    %v202 = vld [vmem:[#allocation7 + $0x18] sm:$0xf]
    %v203 = vld [vmem:[#allocation7 + $0x1c] sm:$0xf]
    %v204 = vld [vmem:[#allocation7 + $0x20] sm:$0xf]
    %v205 = vld [vmem:[#allocation7 + $0x24] sm:$0xf]
    %v206 = vld [vmem:[#allocation7 + $0x28] sm:$0xf]
    %v207 = vld [vmem:[#allocation7 + $0x2c] sm:$0xf]
    %v208 = vld [vmem:[#allocation7 + $0x30] sm:$0xf]
    %v209 = vld [vmem:[#allocation7 + $0x34] sm:$0xf]
    %v210 = vld [vmem:[#allocation7 + $0x38] sm:$0xf]
    %v211 = vld [vmem:[#allocation7 + $0x3c] sm:$0xf]
    %v212 = vld [vmem:[%s4] sm:$0x1]
    %v214 = vlaneseq
    %v215 = vshrl.u32 %v214, 7
    %v216 = vsub.s32 0, %v215
    %v217 = vrot.slane %v212, %v216
    %v235 = vunpack.c.l.b16 %v196
    %v236 = vunpack.c.l.b16 %v197
    %v237 = vunpack.c.l.b16 %v198
    %v238 = vunpack.c.l.b16 %v199
    %v239 = vunpack.c.l.b16 %v200
    %v240 = vunpack.c.l.b16 %v201
    %v241 = vunpack.c.l.b16 %v202
    %v242 = vunpack.c.l.b16 %v203
    %v243 = vunpack.c.l.b16 %v204
    %v244 = vunpack.c.l.b16 %v205
    %v245 = vunpack.c.l.b16 %v206
    %v246 = vunpack.c.l.b16 %v207
    %v247 = vunpack.c.l.b16 %v208
    %v248 = vunpack.c.l.b16 %v209
    %v249 = vunpack.c.l.b16 %v210
    %v250 = vunpack.c.l.b16 %v211
    %v251 = vpack.c.b16 %v236, %v235
    %v252 = vpack.c.b16 %v238, %v237
    %v253 = vpack.c.b16 %v240, %v239
    %v254 = vpack.c.b16 %v242, %v241
    %v255 = vpack.c.b16 %v244, %v243
    %v256 = vpack.c.b16 %v246, %v245
    %v257 = vpack.c.b16 %v248, %v247
    %v258 = vpack.c.b16 %v250, %v249
    %267 = vmatprep.subr.bf16.mxu0 0
    %268 = vmatpush1.bf16.msra.mxu0 %v251
    %269 = vmatprep.subr.bf16.mxu0 0
    %270 = vmatpush1.bf16.msra.mxu0 %v252
    %271 = vmatprep.subr.bf16.mxu0 0
    %272 = vmatpush1.bf16.msra.mxu0 %v253
    %273 = vmatprep.subr.bf16.mxu0 0
    %274 = vmatpush1.bf16.msra.mxu0 %v254
    %275 = vmatprep.subr.bf16.mxu0 0
    %276 = vmatpush1.bf16.msra.mxu0 %v255
    %277 = vmatprep.subr.bf16.mxu0 0
    %278 = vmatpush1.bf16.msra.mxu0 %v256
    %279 = vmatprep.subr.bf16.mxu0 0
    %280 = vmatpush1.bf16.msra.mxu0 %v257
    %281 = vmatprep.subr.bf16.mxu0 0
    %282 = vmatpush1.bf16.msra.mxu0 %v258
    %283 = vmatprep.subr.bf16.mxu0 0
    %284 = vmatpush1.bf16.msra.mxu0 0
    %285 = vmatprep.subr.bf16.mxu0 0
    %286 = vmatpush1.bf16.msra.mxu0 0
    %287 = vmatprep.subr.bf16.mxu0 0
    %288 = vmatpush1.bf16.msra.mxu0 0
    %289 = vmatprep.subr.bf16.mxu0 0
    %290 = vmatpush1.bf16.msra.mxu0 0
    %291 = vmatprep.subr.bf16.mxu0 0
    %292 = vmatpush1.bf16.msra.mxu0 0
    %293 = vmatprep.subr.bf16.mxu0 0
    %294 = vmatpush1.bf16.msra.mxu0 0
    %295 = vmatprep.subr.bf16.mxu0 0
    %296 = vmatpush1.bf16.msra.mxu0 0
    %297 = vmatprep.subr.bf16.mxu0 0
    %298 = vmatpush1.bf16.msra.mxu0 0
    %299 = vmatprep.mubr.bf16.mxu0 0
    %300 = vmatmul.mubr.bf16.gmra.mrb[0].mxu0 %v195
    %v301 = vpop.f32.mrb[0].mxu0
    %v302 = vadd.f32 %v217, %v301
    %v303 = vpop.f32.mrb[0].mxu0
    %v304 = vpop.f32.mrb[0].mxu0
    %v305 = vpop.f32.mrb[0].mxu0
    %306 = vdwg.mxu0
    %v307 = vmax.f32 %v302, 0.0
    %v308 = vpack.c.bf16 %v307, %v307
    %v309 = vld [vmem:[#allocation8] sm:$0xf]
    %v310 = vld [vmem:[#allocation8 + $0x4] sm:$0xf]
    %v311 = vld [vmem:[#allocation8 + $0x8] sm:$0xf]
    %v312 = vld [vmem:[#allocation8 + $0xc] sm:$0xf]
    %v313 = vld [vmem:[#allocation8 + $0x10] sm:$0xf]
    %v314 = vld [vmem:[#allocation8 + $0x14] sm:$0xf]
    %v315 = vld [vmem:[#allocation8 + $0x18] sm:$0xf]
    %v316 = vld [vmem:[#allocation8 + $0x1c] sm:$0xf]
    %v317 = vld [vmem:[#allocation8 + $0x20] sm:$0xf]
    %v318 = vld [vmem:[#allocation8 + $0x24] sm:$0xf]
    %v319 = vld [vmem:[#allocation8 + $0x28] sm:$0xf]
    %v320 = vld [vmem:[#allocation8 + $0x2c] sm:$0xf]
    %v321 = vld [vmem:[#allocation8 + $0x30] sm:$0xf]
    %v322 = vld [vmem:[#allocation8 + $0x34] sm:$0xf]
    %v323 = vld [vmem:[#allocation8 + $0x38] sm:$0xf]
    %v324 = vld [vmem:[#allocation8 + $0x3c] sm:$0xf]
    %v325 = vld [vmem:[%s6] sm:$0x1]
    %v327 = vlaneseq
    %v328 = vshrl.u32 %v327, 7
    %v329 = vsub.s32 0, %v328
    %v330 = vrot.slane %v325, %v329
    %v348 = vunpack.c.l.b16 %v309
    %v349 = vunpack.c.l.b16 %v310
    %v350 = vunpack.c.l.b16 %v311
    %v351 = vunpack.c.l.b16 %v312
    %v352 = vunpack.c.l.b16 %v313
    %v353 = vunpack.c.l.b16 %v314
    %v354 = vunpack.c.l.b16 %v315
    %v355 = vunpack.c.l.b16 %v316
    %v356 = vunpack.c.l.b16 %v317
    %v357 = vunpack.c.l.b16 %v318
    %v358 = vunpack.c.l.b16 %v319
    %v359 = vunpack.c.l.b16 %v320
    %v360 = vunpack.c.l.b16 %v321
    %v361 = vunpack.c.l.b16 %v322
    %v362 = vunpack.c.l.b16 %v323
    %v363 = vunpack.c.l.b16 %v324
    %v364 = vpack.c.b16 %v349, %v348
    %v365 = vpack.c.b16 %v351, %v350
    %v366 = vpack.c.b16 %v353, %v352
    %v367 = vpack.c.b16 %v355, %v354
    %v368 = vpack.c.b16 %v357, %v356
    %v369 = vpack.c.b16 %v359, %v358
    %v370 = vpack.c.b16 %v361, %v360
    %v371 = vpack.c.b16 %v363, %v362
    %380 = vmatprep.subr.bf16.mxu0 0
    %381 = vmatpush1.bf16.msra.mxu0 %v364
    %382 = vmatprep.subr.bf16.mxu0 0
    %383 = vmatpush1.bf16.msra.mxu0 %v365
    %384 = vmatprep.subr.bf16.mxu0 0
    %385 = vmatpush1.bf16.msra.mxu0 %v366
    %386 = vmatprep.subr.bf16.mxu0 0
    %387 = vmatpush1.bf16.msra.mxu0 %v367
    %388 = vmatprep.subr.bf16.mxu0 0
    %389 = vmatpush1.bf16.msra.mxu0 %v368
    %390 = vmatprep.subr.bf16.mxu0 0
    %391 = vmatpush1.bf16.msra.mxu0 %v369
    %392 = vmatprep.subr.bf16.mxu0 0
    %393 = vmatpush1.bf16.msra.mxu0 %v370
    %394 = vmatprep.subr.bf16.mxu0 0
    %395 = vmatpush1.bf16.msra.mxu0 %v371
    %396 = vmatprep.subr.bf16.mxu0 0
    %397 = vmatpush1.bf16.msra.mxu0 0
    %398 = vmatprep.subr.bf16.mxu0 0
    %399 = vmatpush1.bf16.msra.mxu0 0
    %400 = vmatprep.subr.bf16.mxu0 0
    %401 = vmatpush1.bf16.msra.mxu0 0
    %402 = vmatprep.subr.bf16.mxu0 0
    %403 = vmatpush1.bf16.msra.mxu0 0
    %404 = vmatprep.subr.bf16.mxu0 0
    %405 = vmatpush1.bf16.msra.mxu0 0
    %406 = vmatprep.subr.bf16.mxu0 0
    %407 = vmatpush1.bf16.msra.mxu0 0
    %408 = vmatprep.subr.bf16.mxu0 0
    %409 = vmatpush1.bf16.msra.mxu0 0
    %410 = vmatprep.subr.bf16.mxu0 0
    %411 = vmatpush1.bf16.msra.mxu0 0
    %412 = vmatprep.mubr.bf16.mxu0 0
    %413 = vmatmul.mubr.bf16.gmra.mrb[0].mxu0 %v308
    %v414 = vpop.f32.mrb[0].mxu0
    %v415 = vadd.f32 %v330, %v414
    %v416 = vpop.f32.mrb[0].mxu0
    %v417 = vpop.f32.mrb[0].mxu0
    %v418 = vpop.f32.mrb[0].mxu0
    %419 = vdwg.mxu0
    %v420 = vmax.f32 %v415, 0.0
    %421 = vst [vmem:[#allocation10] sm:$0xff] %v420
    // Predicated region
    $region46: #{tpu_custom_call.1} parent=1 // pred_check
      _
    $region47: #{tpu_custom_call.1} parent=1 // pred_check_branch
      %423 = sbr.rel (0) target = $region49
    $region48: #{tpu_custom_call.1} parent=1 // pred_region
      %s425 = ssub.s32 128, 128
      %426 = vsyncadd [#allocation4], %s425
      %s428 = sshll.u32 [#allocation10], 4
      %s429 = int_to_ptr.vmem [resolvable:$true] %s428
      %431 = dma.vmem_to_hbm [thread:$0]  %s429, 128, %s7, [#allocation4]
    $region49: #{tpu_custom_call.1} parent=1 // pred_fallthru
      _
    // Predicated region
    $region50: #{tpu_custom_call.1} parent=1 // pred_check
      _
    $region51: #{tpu_custom_call.1} parent=1 // pred_check_branch
      %433 = sbr.rel (0) target = $region53
    $region52: #{tpu_custom_call.1} parent=1 // pred_region
      %434 = dma.done [#allocation4], 128
    $region53: #{tpu_custom_call.1} parent=1 // pred_fallthru
      _
    %435 = vsyncpa [#allocation3], 1
    %436 = vsyncpa [#allocation6], 1
    %437 = vsyncpa [#allocation9], 1
    %438 = vsyncpa [#allocation4], 1

// kernel: tpu_custom_call.1
$region0: #{tpu_custom_call.1}
  #allocation0 [shape = 'u32[]', space=smem, size = 0x4, offset = 0x4, fixed_abs, tag = 'smem constant byte address 0x4 - core index']
  #allocation1 [shape = 'u32[144,128]{1,0:T(1,128)}', space=vmem, size = 0x12000, scoped, tag = 'internal scratch']
  %s0 = inlined_call_operand.hbm [shape: f32[8,128], index: 0, kind: input, shape index: {}]
  %s1 = inlined_call_operand.hbm [shape: bf16[128,128], index: 1, kind: input, shape index: {}]
  %s2 = inlined_call_operand.vmem [shape: f32[1,128], index: 2, kind: input, shape index: {}]
  %s3 = inlined_call_operand.hbm [shape: bf16[128,128], index: 3, kind: input, shape index: {}]
  %s4 = inlined_call_operand.vmem [shape: f32[1,128], index: 4, kind: input, shape index: {}]
  %s5 = inlined_call_operand.hbm [shape: bf16[128,128], index: 5, kind: input, shape index: {}]
  %s6 = inlined_call_operand.vmem [shape: f32[1,128], index: 6, kind: input, shape index: {}]
  %s7 = inlined_call_operand.hbm [shape: f32[8,128], index: 7, kind: output, shape index: {}]
  %s8 = sld [smem:[#allocation0]]
  $region54: #{tpu_custom_call.1} parent=0
    _
  %s10 = ssub.s32 1, %s8
  %s11 = scalar_select 0, %s10, %s8
  $region1: #{tpu_custom_call.1} parent=0
    #allocation2 [shape = 'u8[4096]{0}', space=vmem, size = 0x1000, scoped, tag = 'input window, operand 0, single buffered']
    #allocation3 [shape = 's32[1]{0}', space=sflag, size = 0x4, scoped, tag = 'scoped memory for tpu_custom_call.1']
    #allocation4 [shape = 's32[1]{0}', space=sflag, size = 0x4, scoped, tag = 'scoped memory for tpu_custom_call.1']
    #allocation5 [shape = 'u8[32768]{0}', space=vmem, size = 0x8000, scoped, tag = 'input window, operand 1, single buffered']
    #allocation6 [shape = 's32[1]{0}', space=sflag, size = 0x4, scoped, tag = 'scoped memory for tpu_custom_call.1']
    #allocation7 [shape = 'u8[32768]{0}', space=vmem, size = 0x8000, scoped, tag = 'input window, operand 3, single buffered']
    #allocation8 [shape = 'u8[32768]{0}', space=vmem, size = 0x8000, scoped, tag = 'input window, operand 5, single buffered']
    #allocation9 [shape = 's32[1]{0}', space=sflag, size = 0x4, scoped, tag = 'scoped memory for tpu_custom_call.1']
    #allocation10 [shape = 'u8[4096]{0}', space=vmem, size = 0x1000, scoped, tag = 'output window, operand 0, single buffered']
    %12 = vsyncpa [#allocation3], 0
    %13 = vsyncpa [#allocation6], 0
    %14 = vsyncpa [#allocation9], 0
    %15 = vsyncpa [#allocation4], 0
    // Predicated region
    $region2: #{tpu_custom_call.1} parent=1 // pred_check
      _
    $region3: #{tpu_custom_call.1} parent=1 // pred_check_branch
      %17 = sbr.rel (0) target = $region5
    $region4: #{tpu_custom_call.1} parent=1 // pred_region
      %s19 = ssub.s32 128, 128
      %20 = vsyncadd [#allocation3], %s19
      %s22 = sshll.u32 [#allocation2], 4
      %s23 = int_to_ptr.vmem [resolvable:$true] %s22
      %25 = dma.hbm_to_vmem [thread:$0]  %s0, 128, %s23, [#allocation3]
    $region5: #{tpu_custom_call.1} parent=1 // pred_fallthru
      _
    // Predicated region
    $region6: #{tpu_custom_call.1} parent=1 // pred_check
      _
    $region7: #{tpu_custom_call.1} parent=1 // pred_check_branch
      %27 = sbr.rel (0) target = $region9
    $region8: #{tpu_custom_call.1} parent=1 // pred_region
      %s29 = ssub.s32 1024, 1024
      %30 = vsyncadd [#allocation6], %s29
      %s31 = sshll.u32 [#allocation5], 4
      %s32 = int_to_ptr.vmem [resolvable:$true] %s31
      %37 = dma.hbm_to_vmem [thread:$0]  %s1, 1024, %s32, [#allocation6], 64, 64, 4
    $region9: #{tpu_custom_call.1} parent=1 // pred_fallthru
      _
    // Predicated region
    $region10: #{tpu_custom_call.1} parent=1 // pred_check
      _
    $region11: #{tpu_custom_call.1} parent=1 // pred_check_branch
      %39 = sbr.rel (0) target = $region13
    $region12: #{tpu_custom_call.1} parent=1 // pred_region
      _
    $region13: #{tpu_custom_call.1} parent=1 // pred_fallthru
      _
    // Predicated region
    $region14: #{tpu_custom_call.1} parent=1 // pred_check
      _
    $region15: #{tpu_custom_call.1} parent=1 // pred_check_branch
      %41 = sbr.rel (0) target = $region17
    $region16: #{tpu_custom_call.1} parent=1 // pred_region
      %s43 = ssub.s32 1024, 1024
      %44 = vsyncadd [#allocation6], %s43
      %s45 = sshll.u32 [#allocation7], 4
      %s46 = int_to_ptr.vmem [resolvable:$true] %s45
      %51 = dma.hbm_to_vmem [thread:$0]  %s3, 1024, %s46, [#allocation6], 64, 64, 4
    $region17: #{tpu_custom_call.1} parent=1 // pred_fallthru
      _
    // Predicated region
    $region18: #{tpu_custom_call.1} parent=1 // pred_check
      _
    $region19: #{tpu_custom_call.1} parent=1 // pred_check_branch
      %53 = sbr.rel (0) target = $region21
    $region20: #{tpu_custom_call.1} parent=1 // pred_region
      _
    $region21: #{tpu_custom_call.1} parent=1 // pred_fallthru
      _
    // Predicated region
    $region22: #{tpu_custom_call.1} parent=1 // pred_check
      _
    $region23: #{tpu_custom_call.1} parent=1 // pred_check_branch
      %55 = sbr.rel (0) target = $region25
    $region24: #{tpu_custom_call.1} parent=1 // pred_region
      %s57 = ssub.s32 1024, 1024
      %58 = vsyncadd [#allocation9], %s57
      %s59 = sshll.u32 [#allocation8], 4
      %s60 = int_to_ptr.vmem [resolvable:$true] %s59
      %65 = dma.hbm_to_vmem [thread:$0]  %s5, 1024, %s60, [#allocation9], 64, 64, 4
    $region25: #{tpu_custom_call.1} parent=1 // pred_fallthru
      _
    // Predicated region
    $region26: #{tpu_custom_call.1} parent=1 // pred_check
      _
    $region27: #{tpu_custom_call.1} parent=1 // pred_check_branch
      %67 = sbr.rel (0) target = $region29
    $region28: #{tpu_custom_call.1} parent=1 // pred_region
      _
    $region29: #{tpu_custom_call.1} parent=1 // pred_fallthru
      _
    // Predicated region
    $region30: #{tpu_custom_call.1} parent=1 // pred_check
      _
    $region31: #{tpu_custom_call.1} parent=1 // pred_check_branch
      %69 = sbr.rel (0) target = $region33
    $region32: #{tpu_custom_call.1} parent=1 // pred_region
      %70 = dma.done [#allocation3], 128
    $region33: #{tpu_custom_call.1} parent=1 // pred_fallthru
      _
    // Predicated region
    $region34: #{tpu_custom_call.1} parent=1 // pred_check
      _
    $region35: #{tpu_custom_call.1} parent=1 // pred_check_branch
      %72 = sbr.rel (0) target = $region37
    $region36: #{tpu_custom_call.1} parent=1 // pred_region
      %73 = dma.done [#allocation6], 1024
    $region37: #{tpu_custom_call.1} parent=1 // pred_fallthru
      _
    // Predicated region
    $region38: #{tpu_custom_call.1} parent=1 // pred_check
      _
    $region39: #{tpu_custom_call.1} parent=1 // pred_check_branch
      %75 = sbr.rel (0) target = $region41
    $region40: #{tpu_custom_call.1} parent=1 // pred_region
      %76 = dma.done [#allocation6], 1024
    $region41: #{tpu_custom_call.1} parent=1 // pred_fallthru
      _
    // Predicated region
    $region42: #{tpu_custom_call.1} parent=1 // pred_check
      _
    $region43: #{tpu_custom_call.1} parent=1 // pred_check_branch
      %78 = sbr.rel (0) target = $region45
    $region44: #{tpu_custom_call.1} parent=1 // pred_region
      %79 = dma.done [#allocation9], 1024
    $region45: #{tpu_custom_call.1} parent=1 // pred_fallthru
      _
    %v81 = vld [vmem:[#allocation2] sm:$0xff]
    %v82 = vpack.c.bf16 %v81, %v81
    %v83 = vld [vmem:[#allocation5] sm:$0xf]
    %v84 = vld [vmem:[#allocation5 + $0x4] sm:$0xf]
    %v85 = vld [vmem:[#allocation5 + $0x8] sm:$0xf]
    %v86 = vld [vmem:[#allocation5 + $0xc] sm:$0xf]
    %v87 = vld [vmem:[#allocation5 + $0x10] sm:$0xf]
    %v88 = vld [vmem:[#allocation5 + $0x14] sm:$0xf]
    %v89 = vld [vmem:[#allocation5 + $0x18] sm:$0xf]
    %v90 = vld [vmem:[#allocation5 + $0x1c] sm:$0xf]
    %v91 = vld [vmem:[#allocation5 + $0x20] sm:$0xf]
    %v92 = vld [vmem:[#allocation5 + $0x24] sm:$0xf]
    %v93 = vld [vmem:[#allocation5 + $0x28] sm:$0xf]
    %v94 = vld [vmem:[#allocation5 + $0x2c] sm:$0xf]
    %v95 = vld [vmem:[#allocation5 + $0x30] sm:$0xf]
    %v96 = vld [vmem:[#allocation5 + $0x34] sm:$0xf]
    %v97 = vld [vmem:[#allocation5 + $0x38] sm:$0xf]
    %v98 = vld [vmem:[#allocation5 + $0x3c] sm:$0xf]
    %v99 = vld [vmem:[%s2] sm:$0x1]
    %v101 = vlaneseq
    %v102 = vshrl.u32 %v101, 7
    %v103 = vsub.s32 0, %v102
    %v104 = vrot.slane %v99, %v103
    %v122 = vunpack.c.l.b16 %v83
    %v123 = vunpack.c.l.b16 %v84
    %v124 = vunpack.c.l.b16 %v85
    %v125 = vunpack.c.l.b16 %v86
    %v126 = vunpack.c.l.b16 %v87
    %v127 = vunpack.c.l.b16 %v88
    %v128 = vunpack.c.l.b16 %v89
    %v129 = vunpack.c.l.b16 %v90
    %v130 = vunpack.c.l.b16 %v91
    %v131 = vunpack.c.l.b16 %v92
    %v132 = vunpack.c.l.b16 %v93
    %v133 = vunpack.c.l.b16 %v94
    %v134 = vunpack.c.l.b16 %v95
    %v135 = vunpack.c.l.b16 %v96
    %v136 = vunpack.c.l.b16 %v97
    %v137 = vunpack.c.l.b16 %v98
    %v138 = vpack.c.b16 %v123, %v122
    %v139 = vpack.c.b16 %v125, %v124
    %v140 = vpack.c.b16 %v127, %v126
    %v141 = vpack.c.b16 %v129, %v128
    %v142 = vpack.c.b16 %v131, %v130
    %v143 = vpack.c.b16 %v133, %v132
    %v144 = vpack.c.b16 %v135, %v134
    %v145 = vpack.c.b16 %v137, %v136
    %154 = vmatprep.subr.bf16.mxu0 0
    %155 = vmatpush1.bf16.msra.mxu0 %v138
    %156 = vmatprep.subr.bf16.mxu0 0
    %157 = vmatpush1.bf16.msra.mxu0 %v139
    %158 = vmatprep.subr.bf16.mxu0 0
    %159 = vmatpush1.bf16.msra.mxu0 %v140
    %160 = vmatprep.subr.bf16.mxu0 0
    %161 = vmatpush1.bf16.msra.mxu0 %v141
    %162 = vmatprep.subr.bf16.mxu0 0
    %163 = vmatpush1.bf16.msra.mxu0 %v142
    %164 = vmatprep.subr.bf16.mxu0 0
    %165 = vmatpush1.bf16.msra.mxu0 %v143
    %166 = vmatprep.subr.bf16.mxu0 0
    %167 = vmatpush1.bf16.msra.mxu0 %v144
    %168 = vmatprep.subr.bf16.mxu0 0
    %169 = vmatpush1.bf16.msra.mxu0 %v145
    %170 = vmatprep.subr.bf16.mxu0 0
    %171 = vmatpush1.bf16.msra.mxu0 0
    %172 = vmatprep.subr.bf16.mxu0 0
    %173 = vmatpush1.bf16.msra.mxu0 0
    %174 = vmatprep.subr.bf16.mxu0 0
    %175 = vmatpush1.bf16.msra.mxu0 0
    %176 = vmatprep.subr.bf16.mxu0 0
    %177 = vmatpush1.bf16.msra.mxu0 0
    %178 = vmatprep.subr.bf16.mxu0 0
    %179 = vmatpush1.bf16.msra.mxu0 0
    %180 = vmatprep.subr.bf16.mxu0 0
    %181 = vmatpush1.bf16.msra.mxu0 0
    %182 = vmatprep.subr.bf16.mxu0 0
    %183 = vmatpush1.bf16.msra.mxu0 0
    %184 = vmatprep.subr.bf16.mxu0 0
    %185 = vmatpush1.bf16.msra.mxu0 0
    %186 = vmatprep.mubr.bf16.mxu0 0
    %187 = vmatmul.mubr.bf16.gmra.mrb[0].mxu0 %v82
    %v188 = vpop.f32.mrb[0].mxu0
    %v189 = vadd.f32 %v104, %v188
    %v190 = vpop.f32.mrb[0].mxu0
    %v191 = vpop.f32.mrb[0].mxu0
    %v192 = vpop.f32.mrb[0].mxu0
    %193 = vdwg.mxu0
    %v194 = vmax.f32 %v189, 0.0
    %v195 = vpack.c.bf16 %v194, %v194
    %v196 = vld [vmem:[#allocation7] sm:$0xf]
    %v197 = vld [vmem:[#allocation7 + $0x4] sm:$0xf]
    %v198 = vld [vmem:[#allocation7 + $0x8] sm:$0xf]
    %v199 = vld [vmem:[#allocation7 + $0xc] sm:$0xf]
    %v200 = vld [vmem:[#allocation7 + $0x10] sm:$0xf]
    %v201 = vld [vmem:[#allocation7 + $0x14] sm:$0xf]
    %v202 = vld [vmem:[#allocation7 + $0x18] sm:$0xf]
    %v203 = vld [vmem:[#allocation7 + $0x1c] sm:$0xf]
    %v204 = vld [vmem:[#allocation7 + $0x20] sm:$0xf]
    %v205 = vld [vmem:[#allocation7 + $0x24] sm:$0xf]
    %v206 = vld [vmem:[#allocation7 + $0x28] sm:$0xf]
    %v207 = vld [vmem:[#allocation7 + $0x2c] sm:$0xf]
    %v208 = vld [vmem:[#allocation7 + $0x30] sm:$0xf]
    %v209 = vld [vmem:[#allocation7 + $0x34] sm:$0xf]
    %v210 = vld [vmem:[#allocation7 + $0x38] sm:$0xf]
    %v211 = vld [vmem:[#allocation7 + $0x3c] sm:$0xf]
    %v212 = vld [vmem:[%s4] sm:$0x1]
    %v214 = vlaneseq
    %v215 = vshrl.u32 %v214, 7
    %v216 = vsub.s32 0, %v215
    %v217 = vrot.slane %v212, %v216
    %v235 = vunpack.c.l.b16 %v196
    %v236 = vunpack.c.l.b16 %v197
    %v237 = vunpack.c.l.b16 %v198
    %v238 = vunpack.c.l.b16 %v199
    %v239 = vunpack.c.l.b16 %v200
    %v240 = vunpack.c.l.b16 %v201
    %v241 = vunpack.c.l.b16 %v202
    %v242 = vunpack.c.l.b16 %v203
    %v243 = vunpack.c.l.b16 %v204
    %v244 = vunpack.c.l.b16 %v205
    %v245 = vunpack.c.l.b16 %v206
    %v246 = vunpack.c.l.b16 %v207
    %v247 = vunpack.c.l.b16 %v208
    %v248 = vunpack.c.l.b16 %v209
    %v249 = vunpack.c.l.b16 %v210
    %v250 = vunpack.c.l.b16 %v211
    %v251 = vpack.c.b16 %v236, %v235
    %v252 = vpack.c.b16 %v238, %v237
    %v253 = vpack.c.b16 %v240, %v239
    %v254 = vpack.c.b16 %v242, %v241
    %v255 = vpack.c.b16 %v244, %v243
    %v256 = vpack.c.b16 %v246, %v245
    %v257 = vpack.c.b16 %v248, %v247
    %v258 = vpack.c.b16 %v250, %v249
    %267 = vmatprep.subr.bf16.mxu0 0
    %268 = vmatpush1.bf16.msra.mxu0 %v251
    %269 = vmatprep.subr.bf16.mxu0 0
    %270 = vmatpush1.bf16.msra.mxu0 %v252
    %271 = vmatprep.subr.bf16.mxu0 0
    %272 = vmatpush1.bf16.msra.mxu0 %v253
    %273 = vmatprep.subr.bf16.mxu0 0
    %274 = vmatpush1.bf16.msra.mxu0 %v254
    %275 = vmatprep.subr.bf16.mxu0 0
    %276 = vmatpush1.bf16.msra.mxu0 %v255
    %277 = vmatprep.subr.bf16.mxu0 0
    %278 = vmatpush1.bf16.msra.mxu0 %v256
    %279 = vmatprep.subr.bf16.mxu0 0
    %280 = vmatpush1.bf16.msra.mxu0 %v257
    %281 = vmatprep.subr.bf16.mxu0 0
    %282 = vmatpush1.bf16.msra.mxu0 %v258
    %283 = vmatprep.subr.bf16.mxu0 0
    %284 = vmatpush1.bf16.msra.mxu0 0
    %285 = vmatprep.subr.bf16.mxu0 0
    %286 = vmatpush1.bf16.msra.mxu0 0
    %287 = vmatprep.subr.bf16.mxu0 0
    %288 = vmatpush1.bf16.msra.mxu0 0
    %289 = vmatprep.subr.bf16.mxu0 0
    %290 = vmatpush1.bf16.msra.mxu0 0
    %291 = vmatprep.subr.bf16.mxu0 0
    %292 = vmatpush1.bf16.msra.mxu0 0
    %293 = vmatprep.subr.bf16.mxu0 0
    %294 = vmatpush1.bf16.msra.mxu0 0
    %295 = vmatprep.subr.bf16.mxu0 0
    %296 = vmatpush1.bf16.msra.mxu0 0
    %297 = vmatprep.subr.bf16.mxu0 0
    %298 = vmatpush1.bf16.msra.mxu0 0
    %299 = vmatprep.mubr.bf16.mxu0 0
    %300 = vmatmul.mubr.bf16.gmra.mrb[0].mxu0 %v195
    %v301 = vpop.f32.mrb[0].mxu0
    %v302 = vadd.f32 %v217, %v301
    %v303 = vpop.f32.mrb[0].mxu0
    %v304 = vpop.f32.mrb[0].mxu0
    %v305 = vpop.f32.mrb[0].mxu0
    %306 = vdwg.mxu0
    %v307 = vmax.f32 %v302, 0.0
    %v308 = vpack.c.bf16 %v307, %v307
    %v309 = vld [vmem:[#allocation8] sm:$0xf]
    %v310 = vld [vmem:[#allocation8 + $0x4] sm:$0xf]
    %v311 = vld [vmem:[#allocation8 + $0x8] sm:$0xf]
    %v312 = vld [vmem:[#allocation8 + $0xc] sm:$0xf]
    %v313 = vld [vmem:[#allocation8 + $0x10] sm:$0xf]
    %v314 = vld [vmem:[#allocation8 + $0x14] sm:$0xf]
    %v315 = vld [vmem:[#allocation8 + $0x18] sm:$0xf]
    %v316 = vld [vmem:[#allocation8 + $0x1c] sm:$0xf]
    %v317 = vld [vmem:[#allocation8 + $0x20] sm:$0xf]
    %v318 = vld [vmem:[#allocation8 + $0x24] sm:$0xf]
    %v319 = vld [vmem:[#allocation8 + $0x28] sm:$0xf]
    %v320 = vld [vmem:[#allocation8 + $0x2c] sm:$0xf]
    %v321 = vld [vmem:[#allocation8 + $0x30] sm:$0xf]
    %v322 = vld [vmem:[#allocation8 + $0x34] sm:$0xf]
    %v323 = vld [vmem:[#allocation8 + $0x38] sm:$0xf]
    %v324 = vld [vmem:[#allocation8 + $0x3c] sm:$0xf]
    %v325 = vld [vmem:[%s6] sm:$0x1]
    %v327 = vlaneseq
    %v328 = vshrl.u32 %v327, 7
    %v329 = vsub.s32 0, %v328
    %v330 = vrot.slane %v325, %v329
    %v348 = vunpack.c.l.b16 %v309
    %v349 = vunpack.c.l.b16 %v310
    %v350 = vunpack.c.l.b16 %v311
    %v351 = vunpack.c.l.b16 %v312
    %v352 = vunpack.c.l.b16 %v313
    %v353 = vunpack.c.l.b16 %v314
    %v354 = vunpack.c.l.b16 %v315
    %v355 = vunpack.c.l.b16 %v316
    %v356 = vunpack.c.l.b16 %v317
    %v357 = vunpack.c.l.b16 %v318
    %v358 = vunpack.c.l.b16 %v319
    %v359 = vunpack.c.l.b16 %v320
    %v360 = vunpack.c.l.b16 %v321
    %v361 = vunpack.c.l.b16 %v322
    %v362 = vunpack.c.l.b16 %v323
    %v363 = vunpack.c.l.b16 %v324
    %v364 = vpack.c.b16 %v349, %v348
    %v365 = vpack.c.b16 %v351, %v350
    %v366 = vpack.c.b16 %v353, %v352
    %v367 = vpack.c.b16 %v355, %v354
    %v368 = vpack.c.b16 %v357, %v356
    %v369 = vpack.c.b16 %v359, %v358
    %v370 = vpack.c.b16 %v361, %v360
    %v371 = vpack.c.b16 %v363, %v362
    %380 = vmatprep.subr.bf16.mxu0 0
    %381 = vmatpush1.bf16.msra.mxu0 %v364
    %382 = vmatprep.subr.bf16.mxu0 0
    %383 = vmatpush1.bf16.msra.mxu0 %v365
    %384 = vmatprep.subr.bf16.mxu0 0
    %385 = vmatpush1.bf16.msra.mxu0 %v366
    %386 = vmatprep.subr.bf16.mxu0 0
    %387 = vmatpush1.bf16.msra.mxu0 %v367
    %388 = vmatprep.subr.bf16.mxu0 0
    %389 = vmatpush1.bf16.msra.mxu0 %v368
    %390 = vmatprep.subr.bf16.mxu0 0
    %391 = vmatpush1.bf16.msra.mxu0 %v369
    %392 = vmatprep.subr.bf16.mxu0 0
    %393 = vmatpush1.bf16.msra.mxu0 %v370
    %394 = vmatprep.subr.bf16.mxu0 0
    %395 = vmatpush1.bf16.msra.mxu0 %v371
    %396 = vmatprep.subr.bf16.mxu0 0
    %397 = vmatpush1.bf16.msra.mxu0 0
    %398 = vmatprep.subr.bf16.mxu0 0
    %399 = vmatpush1.bf16.msra.mxu0 0
    %400 = vmatprep.subr.bf16.mxu0 0
    %401 = vmatpush1.bf16.msra.mxu0 0
    %402 = vmatprep.subr.bf16.mxu0 0
    %403 = vmatpush1.bf16.msra.mxu0 0
    %404 = vmatprep.subr.bf16.mxu0 0
    %405 = vmatpush1.bf16.msra.mxu0 0
    %406 = vmatprep.subr.bf16.mxu0 0
    %407 = vmatpush1.bf16.msra.mxu0 0
    %408 = vmatprep.subr.bf16.mxu0 0
    %409 = vmatpush1.bf16.msra.mxu0 0
    %410 = vmatprep.subr.bf16.mxu0 0
    %411 = vmatpush1.bf16.msra.mxu0 0
    %412 = vmatprep.mubr.bf16.mxu0 0
    %413 = vmatmul.mubr.bf16.gmra.mrb[0].mxu0 %v308
    %v414 = vpop.f32.mrb[0].mxu0
    %v415 = vadd.f32 %v330, %v414
    %v416 = vpop.f32.mrb[0].mxu0
    %v417 = vpop.f32.mrb[0].mxu0
    %v418 = vpop.f32.mrb[0].mxu0
    %419 = vdwg.mxu0
    %v420 = vmax.f32 %v415, 0.0
    %421 = vst [vmem:[#allocation10] sm:$0xff] %v420
    // Predicated region
    $region46: #{tpu_custom_call.1} parent=1 // pred_check
      _
    $region47: #{tpu_custom_call.1} parent=1 // pred_check_branch
      %423 = sbr.rel (0) target = $region49
    $region48: #{tpu_custom_call.1} parent=1 // pred_region
      %s425 = ssub.s32 128, 128
      %426 = vsyncadd [#allocation4], %s425
      %s428 = sshll.u32 [#allocation10], 4
      %s429 = int_to_ptr.vmem [resolvable:$true] %s428
      %431 = dma.vmem_to_hbm [thread:$0]  %s429, 128, %s7, [#allocation4]
    $region49: #{tpu_custom_call.1} parent=1 // pred_fallthru
      _
    // Predicated region
    $region50: #{tpu_custom_call.1} parent=1 // pred_check
      _
    $region51: #{tpu_custom_call.1} parent=1 // pred_check_branch
      %433 = sbr.rel (0) target = $region53
    $region52: #{tpu_custom_call.1} parent=1 // pred_region
      %434 = dma.done [#allocation4], 128
    $region53: #{tpu_custom_call.1} parent=1 // pred_fallthru
      _
    %435 = vsyncpa [#allocation3], 1
    %436 = vsyncpa [#allocation6], 1
    %437 = vsyncpa [#allocation9], 1
    %438 = vsyncpa [#allocation4], 1

</llo_original>
